<compile_context>
chip_gen: v7x
topology: tpu7x:2x2x1
jax: 0.10.0
libtpu: 0.0.40
codegen_flags: <defaults>
</compile_context>

<pallas_src>
import jax
import jax.numpy as jnp
from jax.experimental import pallas as pl
from jax.experimental.pallas import tpu as pltpu

EPS = 1e-5


def _round_up(x, m):
    return ((x + m - 1) // m) * m


def _stats_kernel(x_ref, w_ref, sum_ref, sumsq_ref):
    # x_ref:     (C, TL)  bf16/f32 input tile (L on lanes)
    # w_ref:     (O, C)   VMEM-resident weight
    # sum_ref:   (O, 1)   resident accumulator (per-channel sum)
    # sumsq_ref: (O, 1)   resident accumulator (per-channel sum of squares)
    first = jnp.logical_and(pl.program_id(0) == 0, pl.program_id(1) == 0)

    @pl.when(first)
    def _init():
        sum_ref[...] = jnp.zeros_like(sum_ref)
        sumsq_ref[...] = jnp.zeros_like(sumsq_ref)

    # (O, C) @ (C, TL) -> (O, TL) on the MXU, f32 accumulation.
    y = jnp.dot(w_ref[...], x_ref[...], preferred_element_type=jnp.float32)

    # Zero-padded lanes (L padded up to a multiple of TL in the wrapper)
    # contribute exactly 0 to both sums, so no masking is required; the mean
    # divides by the true count N*L in the wrapper.
    sum_ref[...] += jnp.sum(y, axis=1, keepdims=True)       # XLU cross-lane reduce
    sumsq_ref[...] += jnp.sum(y * y, axis=1, keepdims=True)


def _apply_kernel(x_ref, w_ref, scale_ref, shift_ref, o_ref):
    # Recompute the cheap matmul, then fused BatchNorm + ReLU:
    #   o = max(y * scale + shift, 0)
    y = jnp.dot(w_ref[...], x_ref[...], preferred_element_type=jnp.float32)
    o_ref[...] = jnp.maximum(y * scale_ref[...] + shift_ref[...], 0.0
                             ).astype(o_ref.dtype)


def linear_norm_activation(x, weight, gamma, beta, *,
                           compute_dtype=jnp.bfloat16, tile_l=512):
    """Forward of LinearNormActivation (depthwise=False, ReLU, train-mode BN).

    x:      (N, in_size, L) float32
    weight: (out_size, in_size) float32   (nn.Linear, bias=False)
    gamma:  (out_size,) float32           (BatchNorm1d weight)
    beta:   (out_size,) float32           (BatchNorm1d bias)
    returns (N, out_size, L) float32
    """
    N, C, L = x.shape
    O = weight.shape[0]
    M = N * L                      # BatchNorm reduction count (true columns)

    # Lane tile: multiple of 128 (lane-dense stores), capped for the v7x
    # 64 MiB VMEM budget (v5e/v6e have 128 MiB and are even less constrained).
    TL = min(tile_l, _round_up(L, 128))
    L_pad = _round_up(L, TL)
    num_l = L_pad // TL

    xw = x.astype(compute_dtype)
    if L_pad != L:
        # Zero padding: padded columns contribute 0 to the BN sums and the
        # corresponding output lanes are sliced off below.
        xw = jnp.pad(xw, ((0, 0), (0, 0), (0, L_pad - L)))
    w = weight.astype(compute_dtype)                         # (O, C)

    x_spec = pl.BlockSpec((None, C, TL), lambda n, j: (n, 0, j))
    w_spec = pl.BlockSpec((O, C), lambda n, j: (0, 0))       # VMEM-resident
    col_spec = pl.BlockSpec((O, 1), lambda n, j: (0, 0))     # resident per-channel

    # Pass 1: per-output-channel sum / sum-of-squares over all N*L columns.
    sums, sumsqs = pl.pallas_call(
        _stats_kernel,
        out_shape=(jax.ShapeDtypeStruct((O, 1), jnp.float32),
                   jax.ShapeDtypeStruct((O, 1), jnp.float32)),
        grid=(N, num_l),
        in_specs=[x_spec, w_spec],
        out_specs=(col_spec, col_spec),
        compiler_params=pltpu.CompilerParams(
            dimension_semantics=("arbitrary", "arbitrary")),
    )(xw, w)

    # Tiny (O-element) finalize in plain JAX: fold BN affine into scale/shift.
    mean = sums / M
    var = jnp.maximum(sumsqs / M - mean * mean, 0.0)  # biased var, guard cancellation
    scale = gamma.reshape(O, 1).astype(jnp.float32) * jax.lax.rsqrt(var + EPS)
    shift = beta.reshape(O, 1).astype(jnp.float32) - mean * scale

    # Pass 2: matmul + fused scale/shift + ReLU, fully parallel over the grid.
    # (If the per-tile work ever exposes DMA latency, bump the x spec to
    #  pipeline_mode=pl.Buffered(3).)
    out = pl.pallas_call(
        _apply_kernel,
        out_shape=jax.ShapeDtypeStruct((N, O, L_pad), jnp.float32),
        grid=(N, num_l),
        in_specs=[x_spec, w_spec, col_spec, col_spec],
        out_specs=pl.BlockSpec((None, O, TL), lambda n, j: (n, 0, j)),
        compiler_params=pltpu.CompilerParams(
            dimension_semantics=("parallel", "parallel")),
    )(xw, w, scale, shift)

    return out[:, :, :L] if L_pad != L else out


def _reference(x, weight, gamma, beta):
    # Pure-JAX reference of the PyTorch forward (depthwise=False, train BN, ReLU).
    y = jnp.einsum("ncl,oc->nol", x, weight)
    mean = jnp.mean(y, axis=(0, 2), keepdims=True)
    var = jnp.mean((y - mean) ** 2, axis=(0, 2), keepdims=True)
    y = (y - mean) * jax.lax.rsqrt(var + EPS)
    y = y * gamma[None, :, None] + beta[None, :, None]
    return jnp.maximum(y, 0.0)


if __name__ == "__main__":
    # Small shapes consistent with the module: batch=2, in_size=4, L=16, out_size=8.
    N, in_size, L, out_size = 2, 4, 16, 8

    key = jax.random.PRNGKey(0)
    kx, kw, kg, kb = jax.random.split(key, 4)
    x = jax.random.normal(kx, (N, in_size, L), dtype=jnp.float32)

    bound = 1.0 / float(in_size) ** 0.5
    weight = jax.random.uniform(kw, (out_size, in_size), jnp.float32, -bound, bound)
    gamma = 1.0 + 0.1 * jax.random.normal(kg, (out_size,), jnp.float32)
    beta = 0.1 * jax.random.normal(kb, (out_size,), jnp.float32)

    ref = _reference(x, weight, gamma, beta)

    # f32 compute path: matches the pure-JAX reference tightly.
    out_f32 = jax.block_until_ready(
        linear_norm_activation(x, weight, gamma, beta, compute_dtype=jnp.float32))
    assert out_f32.shape == (N, out_size, L)
    assert jnp.allclose(out_f32, ref, atol=1e-4, rtol=1e-4), "f32 mismatch vs reference"

    # bf16 matmul-input path (the performance configuration): looser tolerance.
    out_bf16 = jax.block_until_ready(
        linear_norm_activation(x, weight, gamma, beta, compute_dtype=jnp.bfloat16))
    assert out_bf16.shape == (N, out_size, L)
    assert jnp.allclose(out_bf16, ref, atol=5e-2, rtol=5e-2), "bf16 mismatch vs reference"

    print("KERNEL_OK")
</pallas_src>

<mosaic_0001>
module attributes {stable_mosaic.version = 11 : i64} {
  func.func @_stats_kernel(%arg0: i32, %arg1: i32, %arg2: memref<1x4x128xf32, #tpu.memory_space<vmem>>, %arg3: memref<8x4xf32, #tpu.memory_space<vmem>>, %arg4: memref<8x1xf32, #tpu.memory_space<vmem>>, %arg5: memref<8x1xf32, #tpu.memory_space<vmem>>) attributes {dimension_semantics = [#tpu.dimension_semantics<arbitrary>, #tpu.dimension_semantics<arbitrary>], iteration_bounds = array<i64: 2, 1>, scalar_prefetch = 0 : i64, scratch_operands = 0 : i64, tpu.core_type = #tpu.core_type<tc>, window_params = [{transform_indices = @transform_0, window_bounds = array<i64: 1, 4, 128>}, {pipeline_mode = #tpu.pipeline_mode<synchronous>, transform_indices = @transform_1, window_bounds = array<i64: 8, 4>}, {pipeline_mode = #tpu.pipeline_mode<synchronous>, transform_indices = @transform_2, window_bounds = array<i64: 8, 1>}, {pipeline_mode = #tpu.pipeline_mode<synchronous>, transform_indices = @transform_3, window_bounds = array<i64: 8, 1>}]} {
    %c0_i32 = arith.constant 0 : i32
    %0 = arith.cmpi eq, %arg0, %c0_i32 : i32
    %c0_i32_0 = arith.constant 0 : i32
    %1 = arith.cmpi eq, %arg1, %c0_i32_0 : i32
    %2 = arith.andi %0, %1 : i1
    %3 = arith.extui %2 : i1 to i32
    %c0_i32_1 = arith.constant 0 : i32
    %4 = arith.cmpi ne, %3, %c0_i32_1 : i32
    scf.if %4 {
      %cst_16 = arith.constant 0.000000e+00 : f32
      %20 = vector.broadcast %cst_16 : f32 to vector<8x1xf32>
      %c0_17 = arith.constant 0 : index
      %c0_18 = arith.constant 0 : index
      %21 = vector.load %arg4[%c0_17, %c0_18] : memref<8x1xf32, #tpu.memory_space<vmem>>, vector<8x1xf32>
      tpu.vector_store %arg4[%c0_17, %c0_18], %20 {strides = array<i32>} : memref<8x1xf32, #tpu.memory_space<vmem>>, vector<8x1xf32>,
      %cst_19 = arith.constant 0.000000e+00 : f32
      %22 = vector.broadcast %cst_19 : f32 to vector<8x1xf32>
      %c0_20 = arith.constant 0 : index
      %c0_21 = arith.constant 0 : index
      %23 = vector.load %arg5[%c0_20, %c0_21] : memref<8x1xf32, #tpu.memory_space<vmem>>, vector<8x1xf32>
      tpu.vector_store %arg5[%c0_20, %c0_21], %22 {strides = array<i32>} : memref<8x1xf32, #tpu.memory_space<vmem>>, vector<8x1xf32>,
    } else {
    }
    %c0 = arith.constant 0 : index
    %c0_2 = arith.constant 0 : index
    %5 = vector.load %arg3[%c0, %c0_2] : memref<8x4xf32, #tpu.memory_space<vmem>>, vector<8x4xf32>
    %c0_3 = arith.constant 0 : index
    %c0_4 = arith.constant 0 : index
    %c0_5 = arith.constant 0 : index
    %6 = vector.load %arg2[%c0_3, %c0_4, %c0_5] : memref<1x4x128xf32, #tpu.memory_space<vmem>>, vector<1x4x128xf32>
    %7 = vector.shape_cast %6 : vector<1x4x128xf32> to vector<4x128xf32>
    %cst = arith.constant dense<0.000000e+00> : vector<8x128xf32>
    %8 = tpu.matmul %5, %7, %cst {dimension_numbers = #tpu.dot_dimension_numbers<[1], [0], [0], [1], [0, 0, 1, 1], [], []>} : vector<8x4xf32>, vector<4x128xf32>, vector<8x128xf32> -> vector<8x128xf32>
    %c0_6 = arith.constant 0 : index
    %c0_7 = arith.constant 0 : index
    %9 = vector.load %arg4[%c0_6, %c0_7] : memref<8x1xf32, #tpu.memory_space<vmem>>, vector<8x1xf32>
    %cst_8 = arith.constant dense<0.000000e+00> : vector<8xf32>
    %10 = vector.multi_reduction <add>, %8, %cst_8 [1] : vector<8x128xf32> to vector<8xf32>
    %11 = vector.shape_cast %10 : vector<8xf32> to vector<8x1xf32>
    %12 = arith.addf %9, %11 : vector<8x1xf32>
    %c0_9 = arith.constant 0 : index
    %c0_10 = arith.constant 0 : index
    %13 = vector.load %arg4[%c0_9, %c0_10] : memref<8x1xf32, #tpu.memory_space<vmem>>, vector<8x1xf32>
    tpu.vector_store %arg4[%c0_9, %c0_10], %12 {strides = array<i32>} : memref<8x1xf32, #tpu.memory_space<vmem>>, vector<8x1xf32>,
    %c0_11 = arith.constant 0 : index
    %c0_12 = arith.constant 0 : index
    %14 = vector.load %arg5[%c0_11, %c0_12] : memref<8x1xf32, #tpu.memory_space<vmem>>, vector<8x1xf32>
    %15 = arith.mulf %8, %8 : vector<8x128xf32>
    %cst_13 = arith.constant dense<0.000000e+00> : vector<8xf32>
    %16 = vector.multi_reduction <add>, %15, %cst_13 [1] : vector<8x128xf32> to vector<8xf32>
    %17 = vector.shape_cast %16 : vector<8xf32> to vector<8x1xf32>
    %18 = arith.addf %14, %17 : vector<8x1xf32>
    %c0_14 = arith.constant 0 : index
    %c0_15 = arith.constant 0 : index
    %19 = vector.load %arg5[%c0_14, %c0_15] : memref<8x1xf32, #tpu.memory_space<vmem>>, vector<8x1xf32>
    tpu.vector_store %arg5[%c0_14, %c0_15], %18 {strides = array<i32>} : memref<8x1xf32, #tpu.memory_space<vmem>>, vector<8x1xf32>,
    return
  }
  func.func @transform_0(%arg0: i32, %arg1: i32) -> (i32, i32, i32) {
    %c0_i32 = arith.constant 0 : i32
    %c0_i32_0 = arith.constant 0 : i32
    return %arg0, %c0_i32, %arg1 : i32, i32, i32
  }
  func.func @transform_1(%arg0: i32, %arg1: i32) -> (i32, i32) {
    %c0_i32 = arith.constant 0 : i32
    %c0_i32_0 = arith.constant 0 : i32
    %c0_i32_1 = arith.constant 0 : i32
    return %c0_i32, %c0_i32_0 : i32, i32
  }
  func.func @transform_2(%arg0: i32, %arg1: i32) -> (i32, i32) {
    %c0_i32 = arith.constant 0 : i32
    %c0_i32_0 = arith.constant 0 : i32
    %c0_i32_1 = arith.constant 0 : i32
    return %c0_i32, %c0_i32_0 : i32, i32
  }
  func.func @transform_3(%arg0: i32, %arg1: i32) -> (i32, i32) {
    %c0_i32 = arith.constant 0 : i32
    %c0_i32_0 = arith.constant 0 : i32
    %c0_i32_1 = arith.constant 0 : i32
    return %c0_i32, %c0_i32_0 : i32, i32
  }
}

</mosaic_0001>

<llo_original>
// kernel: tpu_custom_call.1
$region0: #{tpu_custom_call.1}
  #allocation0 [shape = 'u32[]', space=smem, size = 0x4, offset = 0x4, fixed_abs, tag = 'smem constant byte address 0x4 - core index']
  #allocation1 [shape = 'u32[144,128]{1,0:T(1,128)}', space=vmem, size = 0x12000, scoped, tag = 'internal scratch']
  %s0 = inlined_call_operand.vmem [shape: f32[2,4,128], index: 0, kind: input, shape index: {}]
  %s1 = inlined_call_operand.vmem [shape: f32[8,4], index: 1, kind: input, shape index: {}]
  %s2 = inlined_call_operand.vmem [shape: f32[8,1], index: 2, kind: output, shape index: {0}]
  %s3 = inlined_call_operand.vmem [shape: f32[8,1], index: 3, kind: output, shape index: {1}]
  %4 = xla_tuple %s2, %s3
  %s5 = sld [smem:[#allocation0]]
  $region53: #{tpu_custom_call.1} parent=0
    _
  %s7 = ssub.s32 1, %s5
  %s8 = scalar_select 0, %s7, %s5
  loop: start=0, step=1, limit=4
  $region2: #{tpu_custom_call.1} parent=0 // loop_pre_header
    _
  $region3: #{tpu_custom_call.1} parent=0 // loop_header
    %s10 = sphi 0, %s14
    %p11 = scmp.ge.s32.totalorder %s10, 4
    %s17 = sphi 0, %s29
    %s18 = sphi 0, %s25
    %s19 = sphi 0, %s17
    %s20 = sphi 0, %s18
    %s21 = sphi 0, %s19
    %s22 = sphi 0, %s20
    %s34 = sphi 0, %s36
    %s37 = sphi 0, %s34
    %s38 = sphi 0, %s37
    %s54 = sphi 0, %s38
    %s58 = sphi 0, %s58
    %s60 = sphi 0, %s58
    %s61 = sphi 0, %s60
    %s75 = sphi 0, %s61
    %s79 = sphi 0, %s79
    %s81 = sphi 0, %s79
    %s82 = sphi 0, %s81
    %s96 = sphi 0, %s82
    %s100 = sphi 0, %s100
    %s102 = sphi 0, %s100
    %s103 = sphi 0, %s102
    %s117 = sphi 0, %s103
  $region4: #{tpu_custom_call.1} parent=0 // loop_header_branch
    %13 = sbr.rel (%p11) target = $region8
  $region5: #{tpu_custom_call.1} parent=0 // loop_body
    %s15 = ssub.s32 %s10, 1
    %s16 = ssub.s32 %s10, 2
    %s23 = sadd.s32 1, %s18
    %p24 = scmp.ge.s32.totalorder %s23, 1
    %s25 = scalar_select %p24, 0, %s23
    %s26 = sadd.s32 1, %s17
    %s27 = scalar_select %p24, %s26, %s17
    %p28 = scmp.ge.s32.totalorder %s27, 2
    %s29 = scalar_select %p28, 0, %s27
    %s30 = ssub.s32 %s17, %s29
    %s31 = ssub.s32 %s18, %s25
    %s32 = sor.u32 %s30, %s31
    %p33 = scmp.eq.s32.totalorder %s32, 0
    %s35 = sadd.s32 %s34, 1
    %s36 = scalar_select %p33, %s34, %s35
    %p39 = pneg %p33
    %p40 = scmp.eq.s32.totalorder %s10, 1
    %p41 = por %p39, %p40
    %p42 = scmp.ne.s32.totalorder %s34, %s37
    %p43 = scmp.eq.s32.totalorder %s10, 0
    %p44 = por %p42, %p43
    %p45 = scmp.ne.s32.totalorder %s34, %s37
    %p46 = scmp.eq.s32.totalorder %s15, 1
    %p47 = por %p45, %p46
    %p48 = scmp.ne.s32.totalorder %s37, %s38
    %p49 = scmp.eq.s32.totalorder %s15, 0
    %p50 = por %p48, %p49
    %p51 = scmp.ne.s32.totalorder %s37, %s38
    %p52 = scmp.eq.s32.totalorder %s16, 1
    %p53 = por %p51, %p52
    %p55 = scmp.ne.s32.totalorder %s38, %s54
    %p56 = scmp.eq.s32.totalorder %s16, 0
    %p57 = por %p55, %p56
    %s59 = sadd.s32 %s58, 1
    %p62 = scmp.eq.s32.totalorder %s10, 1
    %p63 = scmp.ne.s32.totalorder %s58, %s60
    %p64 = scmp.eq.s32.totalorder %s10, 0
    %p65 = por %p63, %p64
    %p66 = scmp.ne.s32.totalorder %s58, %s60
    %p67 = scmp.eq.s32.totalorder %s15, 1
    %p68 = por %p66, %p67
    %p69 = scmp.ne.s32.totalorder %s60, %s61
    %p70 = scmp.eq.s32.totalorder %s15, 0
    %p71 = por %p69, %p70
    %p72 = scmp.ne.s32.totalorder %s60, %s61
    %p73 = scmp.eq.s32.totalorder %s16, 1
    %p74 = por %p72, %p73
    %p76 = scmp.ne.s32.totalorder %s61, %s75
    %p77 = scmp.eq.s32.totalorder %s16, 0
    %p78 = por %p76, %p77
    %s80 = sadd.s32 %s79, 1
    %p83 = scmp.eq.s32.totalorder %s10, 1
    %p84 = scmp.ne.s32.totalorder %s79, %s81
    %p85 = scmp.eq.s32.totalorder %s10, 0
    %p86 = por %p84, %p85
    %p87 = scmp.ne.s32.totalorder %s79, %s81
    %p88 = scmp.eq.s32.totalorder %s15, 1
    %p89 = por %p87, %p88
    %p90 = scmp.ne.s32.totalorder %s81, %s82
    %p91 = scmp.eq.s32.totalorder %s15, 0
    %p92 = por %p90, %p91
    %p93 = scmp.ne.s32.totalorder %s81, %s82
    %p94 = scmp.eq.s32.totalorder %s16, 1
    %p95 = por %p93, %p94
    %p97 = scmp.ne.s32.totalorder %s82, %s96
    %p98 = scmp.eq.s32.totalorder %s16, 0
    %p99 = por %p97, %p98
    %s101 = sadd.s32 %s100, 1
    %p104 = scmp.eq.s32.totalorder %s10, 1
    %p105 = scmp.ne.s32.totalorder %s100, %s102
    %p106 = scmp.eq.s32.totalorder %s10, 0
    %p107 = por %p105, %p106
    %p108 = scmp.ne.s32.totalorder %s100, %s102
    %p109 = scmp.eq.s32.totalorder %s15, 1
    %p110 = por %p108, %p109
    %p111 = scmp.ne.s32.totalorder %s102, %s103
    %p112 = scmp.eq.s32.totalorder %s15, 0
    %p113 = por %p111, %p112
    %p114 = scmp.ne.s32.totalorder %s102, %s103
    %p115 = scmp.eq.s32.totalorder %s16, 1
    %p116 = por %p114, %p115
    %p118 = scmp.ne.s32.totalorder %s103, %s117
    %p119 = scmp.eq.s32.totalorder %s16, 0
    %p120 = por %p118, %p119
    %p121 = scmp.le.s32.totalorder 1, %s10
    %p122 = scmp.lt.s32.totalorder %s10, 3
    %p123 = pnand %p121, %p122
    %p124 = pneg %p123
    // Predicated region
    $region9: #{tpu_custom_call.1} parent=5 // pred_check
      _
    $region10: #{tpu_custom_call.1} parent=5 // pred_check_branch
      %126 = sbr.rel (%p123) target = $region12
    $region11: #{tpu_custom_call.1} parent=5 // pred_region
      %s127 = ssub.s32 %s10, 1
      // Predicated region
      $region13: #{tpu_custom_call.1} parent=11 // pred_check
        %p128 = pneg %p71
      $region14: #{tpu_custom_call.1} parent=11 // pred_check_branch
        %130 = sbr.rel (%p128) target = $region16
      $region15: #{tpu_custom_call.1} parent=11 // pred_region
        _
      $region16: #{tpu_custom_call.1} parent=11 // pred_fallthru
        _
    $region12: #{tpu_custom_call.1} parent=5 // pred_fallthru
      _
    %p131 = scmp.lt.s32.totalorder %s10, 2
    // Predicated region
    $region17: #{tpu_custom_call.1} parent=5 // pred_check
      %p132 = pneg %p131
    $region18: #{tpu_custom_call.1} parent=5 // pred_check_branch
      %134 = sbr.rel (%p132) target = $region20
    $region19: #{tpu_custom_call.1} parent=5 // pred_region
      // Predicated region
      $region21: #{tpu_custom_call.1} parent=19 // pred_check
        %p135 = pneg %p44
      $region22: #{tpu_custom_call.1} parent=19 // pred_check_branch
        %137 = sbr.rel (%p135) target = $region24
      $region23: #{tpu_custom_call.1} parent=19 // pred_region
        %p138 = scmp.lt.s32.totalorder %s17, 1
        %s139 = scalar_select %p138, %s17, 1
        %p140 = scmp.lt.s32.totalorder %s18, 0
        %s141 = scalar_select %p140, %s18, 0
        %s142 = sadd.s32 %s141, %s139
        %s143 = smul.addr %s142, 4
        %s144 = scalar_lea.vmem %s0, %s143
      $region24: #{tpu_custom_call.1} parent=19 // pred_fallthru
        _
    $region20: #{tpu_custom_call.1} parent=5 // pred_fallthru
      _
    %p145 = scmp.le.s32.totalorder 1, %s10
    %p146 = scmp.lt.s32.totalorder %s10, 3
    %p147 = pnand %p145, %p146
    %p148 = pneg %p147
    // Predicated region
    $region25: #{tpu_custom_call.1} parent=5 // pred_check
      _
    $region26: #{tpu_custom_call.1} parent=5 // pred_check_branch
      %150 = sbr.rel (%p147) target = $region28
    $region27: #{tpu_custom_call.1} parent=5 // pred_region
      %s151 = ssub.s32 %s10, 1
      %p152 = scmp.lt.s32.totalorder %s19, 1
      %s153 = scalar_select %p152, %s19, 1
      %p154 = scmp.lt.s32.totalorder %s20, 0
      %s155 = scalar_select %p154, %s20, 0
      %s156 = sadd.s32 %s155, %s153
      %s157 = smul.addr %s156, 4
      %s158 = scalar_lea.vmem %s0, %s157
      %p159 = pneg %p50
      %p160 = pneg %p47
      %p161 = pneg %p71
      %p162 = pneg %p68
      %p163 = pneg %p92
      %p164 = pneg %p89
      %p165 = pneg %p113
      %p166 = pneg %p110
      %p167 = scmp.lt.s32.totalorder %s19, 1
      %s168 = scalar_select %p167, %s19, 1
      %p169 = scmp.lt.s32.totalorder %s20, 0
      %s170 = scalar_select %p169, %s20, 0
      %s171 = sadd.s32 %s170, %s168
      %s172 = smul.addr %s171, 4
      %s173 = scalar_lea.vmem %s0, %s172
      %p174 = scmp.eq.s32.totalorder %s19, 0
      %p175 = scmp.eq.s32.totalorder %s20, 0
      %p176 = pnand %p174, %p175
      %p177 = pneg %p176
      // Predicated region
      $region29: #{tpu_custom_call.1} parent=27 // pred_check
        _
      $region30: #{tpu_custom_call.1} parent=27 // pred_check_branch
        %179 = sbr.rel (%p176) target = $region32
      $region31: #{tpu_custom_call.1} parent=27 // pred_region
        %vm180 = vcmask 7168
        %181 = vst.msk [vmem:[%s2] sm:$0xff] %vm180, 0.0
        %182 = vst.msk [vmem:[%s3] sm:$0xff] %vm180, 0.0
      $region32: #{tpu_custom_call.1} parent=27 // pred_fallthru
        _
      %v183 = vld [vmem:[%s1] sm:$0xff]
      %v184 = vld [vmem:[%s173] sm:$0xf]
      %vm185 = vcmask 31744
      %v187 = vsel %vm185, %v183, 0
      %vm189 = vcmask 1043456
      %v191 = vsel %vm189, %v184, 0
      %193 = vmatprep.subr.mxu0 0.0
      %194 = vmatpush1.msra.mxu0 %v191
      %195 = vmatprep.subr.mxu0 0.0
      %196 = vmatpush1.msra.mxu0 0.0
      %197 = vmatprep.subr.mxu0 0.0
      %198 = vmatpush1.msra.mxu0 0.0
      %199 = vmatprep.subr.mxu0 0.0
      %200 = vmatpush1.msra.mxu0 0.0
      %201 = vmatprep.subr.mxu0 0.0
      %202 = vmatpush1.msra.mxu0 0.0
      %203 = vmatprep.subr.mxu0 0.0
      %204 = vmatpush1.msra.mxu0 0.0
      %205 = vmatprep.subr.mxu0 0.0
      %206 = vmatpush1.msra.mxu0 0.0
      %207 = vmatprep.subr.mxu0 0.0
      %208 = vmatpush1.msra.mxu0 0.0
      %209 = vmatprep.subr.mxu0 0.0
      %210 = vmatpush1.msra.mxu0 0.0
      %211 = vmatprep.subr.mxu0 0.0
      %212 = vmatpush1.msra.mxu0 0.0
      %213 = vmatprep.subr.mxu0 0.0
      %214 = vmatpush1.msra.mxu0 0.0
      %215 = vmatprep.subr.mxu0 0.0
      %216 = vmatpush1.msra.mxu0 0.0
      %217 = vmatprep.subr.mxu0 0.0
      %218 = vmatpush1.msra.mxu0 0.0
      %219 = vmatprep.subr.mxu0 0.0
      %220 = vmatpush1.msra.mxu0 0.0
      %221 = vmatprep.subr.mxu0 0.0
      %222 = vmatpush1.msra.mxu0 0.0
      %223 = vmatprep.subr.mxu0 0.0
      %224 = vmatpush1.msra.mxu0 0.0
      %225 = vmatprep.subr.mxu0 0.0
      %226 = vmatpush1.msra.mxu0 0.0
      %227 = vmatprep.subr.mxu0 0.0
      %228 = vmatpush1.msra.mxu0 0.0
      %229 = vmatprep.subr.mxu0 0.0
      %230 = vmatpush1.msra.mxu0 0.0
      %231 = vmatprep.subr.mxu0 0.0
      %232 = vmatpush1.msra.mxu0 0.0
      %233 = vmatprep.subr.mxu0 0.0
      %234 = vmatpush1.msra.mxu0 0.0
      %235 = vmatprep.subr.mxu0 0.0
      %236 = vmatpush1.msra.mxu0 0.0
      %237 = vmatprep.subr.mxu0 0.0
      %238 = vmatpush1.msra.mxu0 0.0
      %239 = vmatprep.subr.mxu0 0.0
      %240 = vmatpush1.msra.mxu0 0.0
      %241 = vmatprep.subr.mxu0 0.0
      %242 = vmatpush1.msra.mxu0 0.0
      %243 = vmatprep.subr.mxu0 0.0
      %244 = vmatpush1.msra.mxu0 0.0
      %245 = vmatprep.subr.mxu0 0.0
      %246 = vmatpush1.msra.mxu0 0.0
      %247 = vmatprep.subr.mxu0 0.0
      %248 = vmatpush1.msra.mxu0 0.0
      %249 = vmatprep.subr.mxu0 0.0
      %250 = vmatpush1.msra.mxu0 0.0
      %251 = vmatprep.subr.mxu0 0.0
      %252 = vmatpush1.msra.mxu0 0.0
      %253 = vmatprep.subr.mxu0 0.0
      %254 = vmatpush1.msra.mxu0 0.0
      %255 = vmatprep.subr.mxu0 0.0
      %256 = vmatpush1.msra.mxu0 0.0
      %257 = vmatprep.mubr.f32.mxu0 0.0
      %258 = vmatmul.mubr.f32.gmra.mrb[0].mxu0 %v187
      %v259 = vpop.f32.mrb[0].mxu0
      %v260 = vadd.f32 0.0, %v259
      %v261 = vpop.f32.mrb[0].mxu0
      %262 = vdwg.mxu0
      %v263 = vld [vmem:[%s2] sm:$0xff]
      %264 = vadd.xlane.f32.xlu0 %v260
      %v265 = vpop.xlane.xlu0 %264
      %v266 = vadd.f32 %v263, %v265
      %vm267 = vcmask 7168
      %268 = vst.msk [vmem:[%s2] sm:$0xff] %vm267, %v266
      %v269 = vld [vmem:[%s3] sm:$0xff]
      %v270 = vmul.f32 %v260, %v260
      %271 = vadd.xlane.f32.xlu0 %v270
      %v272 = vpop.xlane.xlu0 %271
      %v273 = vadd.f32 %v269, %v272
      %274 = vst.msk [vmem:[%s3] sm:$0xff] %vm267, %v273
      // Predicated region
      $region33: #{tpu_custom_call.1} parent=27 // pred_check
        %p275 = pneg %p89
      $region34: #{tpu_custom_call.1} parent=27 // pred_check_branch
        %277 = sbr.rel (%p275) target = $region36
      $region35: #{tpu_custom_call.1} parent=27 // pred_region
        _
      $region36: #{tpu_custom_call.1} parent=27 // pred_fallthru
        _
      // Predicated region
      $region37: #{tpu_custom_call.1} parent=27 // pred_check
        %p278 = pneg %p110
      $region38: #{tpu_custom_call.1} parent=27 // pred_check_branch
        %280 = sbr.rel (%p278) target = $region40
      $region39: #{tpu_custom_call.1} parent=27 // pred_region
        _
      $region40: #{tpu_custom_call.1} parent=27 // pred_fallthru
        _
      // Predicated region
      $region41: #{tpu_custom_call.1} parent=27 // pred_check
        %p281 = pneg %p89
      $region42: #{tpu_custom_call.1} parent=27 // pred_check_branch
        %283 = sbr.rel (%p281) target = $region44
      $region43: #{tpu_custom_call.1} parent=27 // pred_region
        _
      $region44: #{tpu_custom_call.1} parent=27 // pred_fallthru
        _
      // Predicated region
      $region45: #{tpu_custom_call.1} parent=27 // pred_check
        %p284 = pneg %p110
      $region46: #{tpu_custom_call.1} parent=27 // pred_check_branch
        %286 = sbr.rel (%p284) target = $region48
      $region47: #{tpu_custom_call.1} parent=27 // pred_region
        _
      $region48: #{tpu_custom_call.1} parent=27 // pred_fallthru
        _
    $region28: #{tpu_custom_call.1} parent=5 // pred_fallthru
      _
    %p287 = scmp.le.s32.totalorder 2, %s10
    // Predicated region
    $region49: #{tpu_custom_call.1} parent=5 // pred_check
      %p288 = pneg %p287
    $region50: #{tpu_custom_call.1} parent=5 // pred_check_branch
      %290 = sbr.rel (%p288) target = $region52
    $region51: #{tpu_custom_call.1} parent=5 // pred_region
      %s291 = ssub.s32 %s10, 2
    $region52: #{tpu_custom_call.1} parent=5 // pred_fallthru
      _
  $region6: #{tpu_custom_call.1} parent=0 // loop_footer
    %s14 = sadd.s32 1, %s10
  $region7: #{tpu_custom_call.1} parent=0 // loop_footer_branch
    %9 = sbr.rel target = $region3
  $region8: #{tpu_custom_call.1} parent=0 // loop_exit
    _

</llo_original>
